<compile_context>
chip_gen: v7x
topology: tpu7x:2x2x1
jax: 0.10.0
libtpu: 0.0.40
codegen_flags: <defaults>
</compile_context>

<pallas_src>
import functools
import math

import jax
import jax.numpy as jnp
from jax.experimental import pallas as pl
from jax.experimental.pallas import tpu as pltpu


_VMEM_BUDGET = 36 * 1024 * 1024      # target for the double-buffered working set (v7x-safe)
_X_RESIDENT_MAX = 4 * 1024 * 1024    # keep x fully VMEM-resident below this many bf16 bytes


def _round_up(x, n):
    return -(-x // n) * n


def _pick_tile(dim, unit, prefer):
    """Multiple of `unit` <= prefer minimizing total padded size (largest on ties)."""
    padded = _round_up(dim, unit)
    if padded <= prefer:
        return padded
    best_t, best_total = unit, None
    t = max(unit, (prefer // unit) * unit)
    while t >= unit:
        total = _round_up(dim, t)
        if best_total is None or total < best_total:
            best_t, best_total = t, total
        t -= unit
    return best_t


def _select_tiles(B, C, D, out_bytes, prefer_tb=512, prefer_tc=1024):
    """Pick (tile_b, tile_c) under the double-buffered VMEM budget."""
    prefer_tb = max(8, prefer_tb)
    prefer_tc = max(128, prefer_tc)
    while True:
        tile_b = _pick_tile(B, 8, prefer_tb)
        tile_c = _pick_tile(C, 128, prefer_tc)
        b_pad = _round_up(B, tile_b)
        x_cost = b_pad * D * 2 if b_pad * D * 2 <= _X_RESIDENT_MAX else tile_b * D * 2
        est = 2 * (tile_c * D * 2      # bf16 W tile
                   + tile_c * 4        # f32 s/||w|| tile
                   + x_cost            # bf16 x (resident block or per-B tile)
                   + tile_b * 4        # labels
                   + tile_b * tile_c * out_bytes)
        if est <= _VMEM_BUDGET or (tile_c <= 128 and tile_b <= 8):
            return tile_b, tile_c
        if tile_c > 128:
            prefer_tc = max(128, (tile_c // 2) // 128 * 128)
        else:
            prefer_tb = max(8, (tile_b // 2) // 8 * 8)


def _margin_cosine_kernel(x_ref, w_ref, winv_ref, label_ref, o_ref, *,
                          s_times_m, tile_b, tile_c, x_resident):
    # Grid = (C tiles [outer, "parallel"], B tiles [inner, "arbitrary"]).
    # x_ref:    (B_pad, D) bf16 (resident) or (tile_b, D) bf16
    # w_ref:    (tile_c, D) bf16   -- resident across all inner B steps
    # winv_ref: (1, tile_c) f32    -- s / ||w_row||, rides along with the W tile
    # label_ref:(B_pad, 1) / (tile_b, 1) int32
    # o_ref:    (tile_b, tile_c) out_dtype
    j = pl.program_id(0)  # C-tile index (outer grid axis)

    if x_resident:
        row0 = pl.multiple_of(pl.program_id(1) * tile_b, tile_b)
        x = x_ref[pl.ds(row0, tile_b), :]
        labels = label_ref[pl.ds(row0, tile_b), :]
    else:
        x = x_ref[...]
        labels = label_ref[...]

    # bf16 MXU matmul, f32 accumulation, contracting the last dim of BOTH operands
    # (no transpose of the resident weight tile).
    raw = jax.lax.dot_general(
        x, w_ref[...],
        dimension_numbers=(((1,), (1,)), ((), ())),
        preferred_element_type=jnp.float32,
    )                                                        # (tile_b, tile_c) f32

    # x is pre-normalized, so raw = cosine * ||w||; one broadcast multiply gives
    # s * cosine.  All norm/rsqrt work was hoisted to the wrapper.
    scaled = raw * winv_ref[...]

    # CosFace margin: subtract s*m only at the label column (global column index,
    # since the C axis is tiled on grid axis 0).
    col_ids = j * tile_c + jax.lax.broadcasted_iota(jnp.int32, scaled.shape, 1)
    is_label = col_ids == labels
    o_ref[...] = jnp.where(is_label, scaled - s_times_m, scaled).astype(o_ref.dtype)


def margin_cosine_product(x, weight, label, *, s=30.0, m=0.3,
                          tile_b=None, tile_c=None, x_resident=None,
                          out_dtype=jnp.float32):
    """x: (B, D), weight: (C, D), label: (B,) int -> (B, C) out_dtype."""
    B, D = x.shape
    C, D2 = weight.shape
    assert D == D2
    out_bytes = jnp.dtype(out_dtype).itemsize

    # --- wrapper-side prep (fuses in XLA, each is one cheap pass) -------------
    xf = x.astype(jnp.float32)
    wf = weight.astype(jnp.float32)
    # F.normalize eps=1e-12:  1/max(||r||,1e-12) == rsqrt(max(||r||^2, 1e-24)).
    x_n = (xf * jax.lax.rsqrt(
        jnp.maximum(jnp.sum(xf * xf, axis=-1, keepdims=True), 1e-24))
           ).astype(jnp.bfloat16)                                   # (B, D) bf16
    w_b = wf.astype(jnp.bfloat16)                                   # (C, D) bf16
    w_inv_s = (float(s) * jax.lax.rsqrt(
        jnp.maximum(jnp.sum(wf * wf, axis=-1), 1e-24))).reshape(1, C)  # (1, C) f32
    label2d = label.reshape(B, 1).astype(jnp.int32)

    # --- tiles, padding, residency -------------------------------------------
    if tile_b is None or tile_c is None:
        tb_auto, tc_auto = _select_tiles(B, C, D, out_bytes)
        tile_b = tb_auto if tile_b is None else tile_b
        tile_c = tc_auto if tile_c is None else tile_c
    assert tile_b % 8 == 0 and tile_c % 128 == 0, "tile_b % 8 == 0, tile_c % 128 == 0"

    B_pad = _round_up(B, tile_b)
    C_pad = _round_up(C, tile_c)
    grid_c = C_pad // tile_c
    grid_b = B_pad // tile_b

    if B_pad != B:
        x_n = jnp.pad(x_n, ((0, B_pad - B), (0, 0)))
        label2d = jnp.pad(label2d, ((0, B_pad - B), (0, 0)), constant_values=-1)
    if C_pad != C:
        w_b = jnp.pad(w_b, ((0, C_pad - C), (0, 0)))
        w_inv_s = jnp.pad(w_inv_s, ((0, 0), (0, C_pad - C)))

    if x_resident is None:
        # Keep x/labels fully VMEM-resident (single DMA, no per-C-tile re-stream)
        # when small; require 16-row alignment for bf16 dynamic sublane slices.
        x_resident = (B_pad * D * 2 <= _X_RESIDENT_MAX) and (grid_b == 1 or tile_b % 16 == 0)
    x_resident = bool(x_resident)

    if x_resident:
        x_spec = pl.BlockSpec((B_pad, D), lambda j, i: (0, 0))
        lbl_spec = pl.BlockSpec((B_pad, 1), lambda j, i: (0, 0))
    else:
        x_spec = pl.BlockSpec((tile_b, D), lambda j, i: (i, 0))
        lbl_spec = pl.BlockSpec((tile_b, 1), lambda j, i: (i, 0))

    kernel = functools.partial(
        _margin_cosine_kernel,
        s_times_m=float(s) * float(m), tile_b=tile_b, tile_c=tile_c,
        x_resident=x_resident)

    # Explicit VMEM limit: above v5e's 16 MiB scoped default, below v7x's 64 MiB
    # physical (auto tile selection keeps the working set <= ~36 MiB).
    est_vmem = 2 * (tile_c * D * 2 + tile_c * 4
                    + (B_pad if x_resident else tile_b) * D * 2
                    + (B_pad if x_resident else tile_b) * 4
                    + tile_b * tile_c * out_bytes)
    vmem_limit = int(min(max(48 * 1024 * 1024, int(est_vmem * 1.5)), 100 * 1024 * 1024))

    cost = pl.CostEstimate(
        flops=2 * B_pad * C_pad * D + 2 * B_pad * C_pad,
        transcendentals=0,  # all rsqrt hoisted to the wrapper
        bytes_accessed=(w_b.nbytes + w_inv_s.nbytes
                        + x_n.nbytes * (1 if x_resident else grid_c)
                        + label2d.nbytes * (1 if x_resident else grid_c)
                        + B_pad * C_pad * out_bytes),
    )

    out = pl.pallas_call(
        kernel,
        out_shape=jax.ShapeDtypeStruct((B_pad, C_pad), out_dtype),
        grid=(grid_c, grid_b),  # B is the inner axis -> W tile resident across it
        in_specs=[
            x_spec,                                            # x (resident or per-B tile)
            pl.BlockSpec((tile_c, D), lambda j, i: (j, 0)),    # W: ignores B axis
            pl.BlockSpec((1, tile_c), lambda j, i: (0, j)),    # s/||w||: ignores B axis
            lbl_spec,                                          # labels
        ],
        out_specs=pl.BlockSpec((tile_b, tile_c), lambda j, i: (i, j)),
        compiler_params=pltpu.CompilerParams(
            # C parallel / B arbitrary: on v7x the megacore split lands on C so
            # each core streams only its half of W; measured-neutral on v5e/v6e.
            dimension_semantics=("parallel", "arbitrary"),
            vmem_limit_bytes=vmem_limit,
        ),
        cost_estimate=cost,
    )(x_n, w_b, w_inv_s, label2d)

    if B_pad != B or C_pad != C:
        out = out[:B, :C]
    return out


def _reference(x, weight, label, s=30.0, m=0.3):
    xn = x / jnp.maximum(jnp.linalg.norm(x, axis=-1, keepdims=True), 1e-12)
    wn = weight / jnp.maximum(jnp.linalg.norm(weight, axis=-1, keepdims=True), 1e-12)
    cosine = xn @ wn.T
    one_hot = jax.nn.one_hot(label, weight.shape[0], dtype=jnp.float32)
    return s * (cosine - m * one_hot)


if __name__ == "__main__":
    # Small shapes consistent with the module; B / out_features deliberately not
    # multiples of (8, 128) so the padding path is exercised too.
    B, in_features, out_features = 30, 64, 250
    s_val, m_val = 30.0, 0.3

    key = jax.random.PRNGKey(0)
    kx, kw, kl = jax.random.split(key, 3)

    x = jax.random.normal(kx, (B, in_features), dtype=jnp.float32)

    # Deterministic xavier_uniform_ init for weight of shape (out_features, in_features)
    bound = math.sqrt(6.0 / (in_features + out_features))
    weight = jax.random.uniform(
        kw, (out_features, in_features), dtype=jnp.float32, minval=-bound, maxval=bound
    )
    label = jax.random.randint(kl, (B,), 0, out_features, dtype=jnp.int32)

    ref = _reference(x, weight, label, s=s_val, m=m_val)

    # Exercise: auto tiles (single padded tile), a real multi-tile grid with
    # resident x, and a multi-tile grid with streamed x.
    configs = [
        dict(),
        dict(tile_b=16, tile_c=128),
        dict(tile_b=8, tile_c=128, x_resident=False),
    ]
    for cfg in configs:
        out = margin_cosine_product(x, weight, label, s=s_val, m=m_val, **cfg)
        out = jax.block_until_ready(out)
        assert out.shape == (B, out_features)
        # bf16 MXU operands (normalized in f32 first) with f32 accumulation: allow
        # ~1e-2-level relative error at the s=30 output scale (any tiling / margin
        # placement bug would be ~s*m = 9).
        assert jnp.allclose(out, ref, atol=0.15, rtol=2e-2), (
            f"mismatch vs reference (cfg={cfg}), "
            f"max abs diff = {jnp.max(jnp.abs(out - ref))}"
        )
    # TODO(synk): offer an f32-matmul path if exact parity with the f32 PyTorch
    # module is required (current bf16 streaming trades ~1e-1 absolute logit error
    # for ~2x less HBM traffic).

    print("KERNEL_OK")
</pallas_src>

<mosaic_0001>
module attributes {stable_mosaic.version = 11 : i64} {
  func.func @_margin_cosine_kernel(%arg0: i32, %arg1: i32, %arg2: memref<32x64xbf16, #tpu.memory_space<vmem>>, %arg3: memref<256x64xbf16, #tpu.memory_space<vmem>>, %arg4: memref<1x256xf32, #tpu.memory_space<vmem>>, %arg5: memref<32x1xi32, #tpu.memory_space<vmem>>, %arg6: memref<32x256xf32, #tpu.memory_space<vmem>>) attributes {dimension_semantics = [#tpu.dimension_semantics<parallel>, #tpu.dimension_semantics<arbitrary>], iteration_bounds = array<i64: 1, 1>, scalar_prefetch = 0 : i64, scratch_operands = 0 : i64, tpu.core_type = #tpu.core_type<tc>, window_params = [{pipeline_mode = #tpu.pipeline_mode<synchronous>, transform_indices = @transform_0, window_bounds = array<i64: 32, 64>}, {transform_indices = @transform_1, window_bounds = array<i64: 256, 64>}, {transform_indices = @transform_2, window_bounds = array<i64: 1, 256>}, {pipeline_mode = #tpu.pipeline_mode<synchronous>, transform_indices = @transform_3, window_bounds = array<i64: 32, 1>}, {transform_indices = @transform_4, window_bounds = array<i64: 32, 256>}]} {
    %c32_i32 = arith.constant 32 : i32
    %0 = arith.muli %arg1, %c32_i32 : i32
    %1 = tpu.assume_multiple %0, 32 : i32
    %2 = arith.index_cast %1 : i32 to index
    %c0 = arith.constant 0 : index
    %3 = vector.load %arg2[%2, %c0] : memref<32x64xbf16, #tpu.memory_space<vmem>>, vector<32x64xbf16>
    %4 = arith.index_cast %1 : i32 to index
    %c0_0 = arith.constant 0 : index
    %5 = vector.load %arg5[%4, %c0_0] : memref<32x1xi32, #tpu.memory_space<vmem>>, vector<32x1xi32>
    %c0_1 = arith.constant 0 : index
    %c0_2 = arith.constant 0 : index
    %6 = vector.load %arg3[%c0_1, %c0_2] : memref<256x64xbf16, #tpu.memory_space<vmem>>, vector<256x64xbf16>
    %cst = arith.constant dense<0.000000e+00> : vector<32x256xf32>
    %7 = tpu.matmul %3, %6, %cst {dimension_numbers = #tpu.dot_dimension_numbers<[1], [1], [0], [0], [0, 0, 1, 0], [], []>} : vector<32x64xbf16>, vector<256x64xbf16>, vector<32x256xf32> -> vector<32x256xf32>
    %c0_3 = arith.constant 0 : index
    %c0_4 = arith.constant 0 : index
    %8 = vector.load %arg4[%c0_3, %c0_4] : memref<1x256xf32, #tpu.memory_space<vmem>>, vector<1x256xf32>
    %9 = vector.broadcast %8 : vector<1x256xf32> to vector<32x256xf32>
    %10 = arith.mulf %7, %9 : vector<32x256xf32>
    %c256_i32 = arith.constant 256 : i32
    %11 = arith.muli %arg0, %c256_i32 : i32
    %12 = tpu.iota {dimensions = array<i32: 1>} : vector<32x256xi32>
    %13 = vector.broadcast %11 : i32 to vector<32x256xi32>
    %14 = arith.addi %13, %12 : vector<32x256xi32>
    %15 = vector.broadcast %5 : vector<32x1xi32> to vector<32x256xi32>
    %16 = arith.cmpi eq, %14, %15 : vector<32x256xi32>
    %cst_5 = arith.constant 9.000000e+00 : f32
    %17 = vector.broadcast %cst_5 : f32 to vector<32x256xf32>
    %18 = arith.subf %10, %17 : vector<32x256xf32>
    %19 = arith.select %16, %18, %10 : vector<32x256xi1>, vector<32x256xf32>
    %c0_6 = arith.constant 0 : index
    %c0_7 = arith.constant 0 : index
    %20 = vector.load %arg6[%c0_6, %c0_7] : memref<32x256xf32, #tpu.memory_space<vmem>>, vector<32x256xf32>
    tpu.vector_store %arg6[%c0_6, %c0_7], %19 {strides = array<i32>} : memref<32x256xf32, #tpu.memory_space<vmem>>, vector<32x256xf32>,
    return
  }
  func.func @transform_0(%arg0: i32, %arg1: i32) -> (i32, i32) {
    %c0_i32 = arith.constant 0 : i32
    %c0_i32_0 = arith.constant 0 : i32
    %c0_i32_1 = arith.constant 0 : i32
    return %c0_i32, %c0_i32_0 : i32, i32
  }
  func.func @transform_1(%arg0: i32, %arg1: i32) -> (i32, i32) {
    %c0_i32 = arith.constant 0 : i32
    %c0_i32_0 = arith.constant 0 : i32
    return %arg0, %c0_i32 : i32, i32
  }
  func.func @transform_2(%arg0: i32, %arg1: i32) -> (i32, i32) {
    %c0_i32 = arith.constant 0 : i32
    %c0_i32_0 = arith.constant 0 : i32
    return %c0_i32, %arg0 : i32, i32
  }
  func.func @transform_3(%arg0: i32, %arg1: i32) -> (i32, i32) {
    %c0_i32 = arith.constant 0 : i32
    %c0_i32_0 = arith.constant 0 : i32
    %c0_i32_1 = arith.constant 0 : i32
    return %c0_i32, %c0_i32_0 : i32, i32
  }
  func.func @transform_4(%arg0: i32, %arg1: i32) -> (i32, i32) {
    %c0_i32 = arith.constant 0 : i32
    return %arg1, %arg0 : i32, i32
  }
}

</mosaic_0001>

<llo_original>
// kernel: tpu_custom_call.1
$region0: #{tpu_custom_call.1}
  #allocation0 [shape = 'u32[]', space=smem, size = 0x4, offset = 0x4, fixed_abs, tag = 'smem constant byte address 0x4 - core index']
  #allocation1 [shape = 'u32[144,128]{1,0:T(1,128)}', space=vmem, size = 0x12000, scoped, tag = 'internal scratch']
  %s0 = inlined_call_operand.vmem [shape: bf16[32,64], index: 0, kind: input, shape index: {}]
  %s1 = inlined_call_operand.vmem [shape: bf16[256,64], index: 1, kind: input, shape index: {}]
  %s2 = inlined_call_operand.vmem [shape: f32[1,256], index: 2, kind: input, shape index: {}]
  %s3 = inlined_call_operand.vmem [shape: s32[32,1], index: 3, kind: input, shape index: {}]
  %s4 = inlined_call_operand.hbm [shape: f32[32,256], index: 4, kind: output, shape index: {}]
  %s5 = sld [smem:[#allocation0]]
  $region26: #{tpu_custom_call.1} parent=0
    _
  %s7 = ssub.s32 1, %s5
  %s8 = scalar_select 0, %s7, %s5
  $region1: #{tpu_custom_call.1} parent=0
    #allocation2 [shape = 'u8[32768]{0}', space=vmem, size = 0x8000, scoped, tag = 'output window, operand 0, single buffered']
    #allocation3 [shape = 's32[1]{0}', space=sflag, size = 0x4, scoped, tag = 'scoped memory for tpu_custom_call.1']
    %9 = vsyncpa [#allocation3], 0
    // Predicated region
    $region2: #{tpu_custom_call.1} parent=1 // pred_check
      _
    $region3: #{tpu_custom_call.1} parent=1 // pred_check_branch
      %11 = sbr.rel (0) target = $region5
    $region4: #{tpu_custom_call.1} parent=1 // pred_region
      _
    $region5: #{tpu_custom_call.1} parent=1 // pred_fallthru
      _
    // Predicated region
    $region6: #{tpu_custom_call.1} parent=1 // pred_check
      _
    $region7: #{tpu_custom_call.1} parent=1 // pred_check_branch
      %13 = sbr.rel (0) target = $region9
    $region8: #{tpu_custom_call.1} parent=1 // pred_region
      _
    $region9: #{tpu_custom_call.1} parent=1 // pred_fallthru
      _
    // Predicated region
    $region10: #{tpu_custom_call.1} parent=1 // pred_check
      _
    $region11: #{tpu_custom_call.1} parent=1 // pred_check_branch
      %15 = sbr.rel (0) target = $region13
    $region12: #{tpu_custom_call.1} parent=1 // pred_region
      _
    $region13: #{tpu_custom_call.1} parent=1 // pred_fallthru
      _
    // Predicated region
    $region14: #{tpu_custom_call.1} parent=1 // pred_check
      _
    $region15: #{tpu_custom_call.1} parent=1 // pred_check_branch
      %17 = sbr.rel (0) target = $region17
    $region16: #{tpu_custom_call.1} parent=1 // pred_region
      _
    $region17: #{tpu_custom_call.1} parent=1 // pred_fallthru
      _
    %s19 = smul.u32 0, 32
    %s20 = sshra.s32 %s19, 3
    %s21 = sand.u32 %s19, 7
    %s22 = smul.addr %s20, 4
    %s23 = scalar_lea.vmem %s0, %s22
    %v24 = vld [vmem:[%s23] sm:$0xf]
    %v25 = vld [vmem:[%s23 + $0x4] sm:$0xf]
    %v26 = vld [vmem:[%s23 + $0x8] sm:$0xf]
    %v27 = vld [vmem:[%s23 + $0xc] sm:$0xf]
    %s28 = scalar_lea.vmem %s3, %s19
    %v29 = vld [vmem:[%s28] sm:$0xff]
    %v30 = vld [vmem:[%s28 + $0x8] sm:$0xff]
    %v31 = vld [vmem:[%s28 + $0x10] sm:$0xff]
    %v32 = vld [vmem:[%s28 + $0x18] sm:$0xff]
    %v33 = vld [vmem:[%s1] sm:$0xf]
    %v34 = vld [vmem:[%s1 + $0x4] sm:$0xf]
    %v35 = vld [vmem:[%s1 + $0x8] sm:$0xf]
    %v36 = vld [vmem:[%s1 + $0xc] sm:$0xf]
    %v37 = vld [vmem:[%s1 + $0x10] sm:$0xf]
    %v38 = vld [vmem:[%s1 + $0x14] sm:$0xf]
    %v39 = vld [vmem:[%s1 + $0x18] sm:$0xf]
    %v40 = vld [vmem:[%s1 + $0x1c] sm:$0xf]
    %v41 = vld [vmem:[%s1 + $0x20] sm:$0xf]
    %v42 = vld [vmem:[%s1 + $0x24] sm:$0xf]
    %v43 = vld [vmem:[%s1 + $0x28] sm:$0xf]
    %v44 = vld [vmem:[%s1 + $0x2c] sm:$0xf]
    %v45 = vld [vmem:[%s1 + $0x30] sm:$0xf]
    %v46 = vld [vmem:[%s1 + $0x34] sm:$0xf]
    %v47 = vld [vmem:[%s1 + $0x38] sm:$0xf]
    %v48 = vld [vmem:[%s1 + $0x3c] sm:$0xf]
    %v49 = vld [vmem:[%s1 + $0x40] sm:$0xf]
    %v50 = vld [vmem:[%s1 + $0x44] sm:$0xf]
    %v51 = vld [vmem:[%s1 + $0x48] sm:$0xf]
    %v52 = vld [vmem:[%s1 + $0x4c] sm:$0xf]
    %v53 = vld [vmem:[%s1 + $0x50] sm:$0xf]
    %v54 = vld [vmem:[%s1 + $0x54] sm:$0xf]
    %v55 = vld [vmem:[%s1 + $0x58] sm:$0xf]
    %v56 = vld [vmem:[%s1 + $0x5c] sm:$0xf]
    %v57 = vld [vmem:[%s1 + $0x60] sm:$0xf]
    %v58 = vld [vmem:[%s1 + $0x64] sm:$0xf]
    %v59 = vld [vmem:[%s1 + $0x68] sm:$0xf]
    %v60 = vld [vmem:[%s1 + $0x6c] sm:$0xf]
    %v61 = vld [vmem:[%s1 + $0x70] sm:$0xf]
    %v62 = vld [vmem:[%s1 + $0x74] sm:$0xf]
    %v63 = vld [vmem:[%s1 + $0x78] sm:$0xf]
    %v64 = vld [vmem:[%s1 + $0x7c] sm:$0xf]
    %v69 = vunpack.c.l.b16 %v24
    %v70 = vunpack.c.l.b16 %v25
    %v71 = vunpack.c.l.b16 %v26
    %v72 = vunpack.c.l.b16 %v27
    %v73 = vpack.c.b16 %v70, %v69
    %v74 = vpack.c.b16 %v72, %v71
    %v107 = vunpack.c.l.b16 %v33
    %v108 = vunpack.c.l.b16 %v34
    %v109 = vunpack.c.l.b16 %v35
    %v110 = vunpack.c.l.b16 %v36
    %v111 = vunpack.c.l.b16 %v37
    %v112 = vunpack.c.l.b16 %v38
    %v113 = vunpack.c.l.b16 %v39
    %v114 = vunpack.c.l.b16 %v40
    %v115 = vunpack.c.l.b16 %v41
    %v116 = vunpack.c.l.b16 %v42
    %v117 = vunpack.c.l.b16 %v43
    %v118 = vunpack.c.l.b16 %v44
    %v119 = vunpack.c.l.b16 %v45
    %v120 = vunpack.c.l.b16 %v46
    %v121 = vunpack.c.l.b16 %v47
    %v122 = vunpack.c.l.b16 %v48
    %v123 = vunpack.c.l.b16 %v49
    %v124 = vunpack.c.l.b16 %v50
    %v125 = vunpack.c.l.b16 %v51
    %v126 = vunpack.c.l.b16 %v52
    %v127 = vunpack.c.l.b16 %v53
    %v128 = vunpack.c.l.b16 %v54
    %v129 = vunpack.c.l.b16 %v55
    %v130 = vunpack.c.l.b16 %v56
    %v131 = vunpack.c.l.b16 %v57
    %v132 = vunpack.c.l.b16 %v58
    %v133 = vunpack.c.l.b16 %v59
    %v134 = vunpack.c.l.b16 %v60
    %v135 = vunpack.c.l.b16 %v61
    %v136 = vunpack.c.l.b16 %v62
    %v137 = vunpack.c.l.b16 %v63
    %v138 = vunpack.c.l.b16 %v64
    %v139 = vpack.c.b16 %v108, %v107
    %v140 = vpack.c.b16 %v110, %v109
    %v141 = vpack.c.b16 %v112, %v111
    %v142 = vpack.c.b16 %v114, %v113
    %v143 = vpack.c.b16 %v116, %v115
    %v144 = vpack.c.b16 %v118, %v117
    %v145 = vpack.c.b16 %v120, %v119
    %v146 = vpack.c.b16 %v122, %v121
    %v147 = vpack.c.b16 %v124, %v123
    %v148 = vpack.c.b16 %v126, %v125
    %v149 = vpack.c.b16 %v128, %v127
    %v150 = vpack.c.b16 %v130, %v129
    %v151 = vpack.c.b16 %v132, %v131
    %v152 = vpack.c.b16 %v134, %v133
    %v153 = vpack.c.b16 %v136, %v135
    %v154 = vpack.c.b16 %v138, %v137
    %vm155 = vcmask 523264
    %v157 = vsel %vm155, %v73, 0
    %v160 = vsel %vm155, %v74, 0
    %v163 = vsel %vm155, %v139, 0
    %v166 = vsel %vm155, %v140, 0
    %v169 = vsel %vm155, %v141, 0
    %v172 = vsel %vm155, %v142, 0
    %v175 = vsel %vm155, %v143, 0
    %v178 = vsel %vm155, %v144, 0
    %v181 = vsel %vm155, %v145, 0
    %v184 = vsel %vm155, %v146, 0
    %v187 = vsel %vm155, %v147, 0
    %v190 = vsel %vm155, %v148, 0
    %v193 = vsel %vm155, %v149, 0
    %v196 = vsel %vm155, %v150, 0
    %v199 = vsel %vm155, %v151, 0
    %v202 = vsel %vm155, %v152, 0
    %v205 = vsel %vm155, %v153, 0
    %v208 = vsel %vm155, %v154, 0
    %210 = vmatprep.subr.bf16.mxu0 0
    %211 = vmatpush1.bf16.xpose.msra.mxu0 %v163
    %212 = vmatprep.subr.bf16.mxu0 0
    %213 = vmatpush1.bf16.xpose.msra.mxu0 %v166
    %214 = vmatprep.subr.bf16.mxu0 0
    %215 = vmatpush1.bf16.xpose.msra.mxu0 %v169
    %216 = vmatprep.subr.bf16.mxu0 0
    %217 = vmatpush1.bf16.xpose.msra.mxu0 %v172
    %218 = vmatprep.subr.bf16.mxu0 0
    %219 = vmatpush1.bf16.xpose.msra.mxu0 %v175
    %220 = vmatprep.subr.bf16.mxu0 0
    %221 = vmatpush1.bf16.xpose.msra.mxu0 %v178
    %222 = vmatprep.subr.bf16.mxu0 0
    %223 = vmatpush1.bf16.xpose.msra.mxu0 %v181
    %224 = vmatprep.subr.bf16.mxu0 0
    %225 = vmatpush1.bf16.xpose.msra.mxu0 %v184
    %226 = vmatprep.subr.bf16.mxu0 0
    %227 = vmatpush1.bf16.xpose.msra.mxu0 %v187
    %228 = vmatprep.subr.bf16.mxu0 0
    %229 = vmatpush1.bf16.xpose.msra.mxu0 %v190
    %230 = vmatprep.subr.bf16.mxu0 0
    %231 = vmatpush1.bf16.xpose.msra.mxu0 %v193
    %232 = vmatprep.subr.bf16.mxu0 0
    %233 = vmatpush1.bf16.xpose.msra.mxu0 %v196
    %234 = vmatprep.subr.bf16.mxu0 0
    %235 = vmatpush1.bf16.xpose.msra.mxu0 %v199
    %236 = vmatprep.subr.bf16.mxu0 0
    %237 = vmatpush1.bf16.xpose.msra.mxu0 %v202
    %238 = vmatprep.subr.bf16.mxu0 0
    %239 = vmatpush1.bf16.xpose.msra.mxu0 %v205
    %240 = vmatprep.subr.bf16.mxu0 0
    %241 = vmatpush1.bf16.xpose.msra.mxu0 %v208
    %242 = vmatprep.mubr.bf16.mxu0 0
    %243 = vmatmul.mubr.bf16.gmra.mrb[0].mxu0 %v157
    %v244 = vpop.f32.mrb[0].mxu0
    %v245 = vadd.f32 0.0, %v244
    %v246 = vpop.f32.mrb[0].mxu0
    %v247 = vadd.f32 0.0, %v246
    %v248 = vpop.f32.mrb[0].mxu0
    %v249 = vadd.f32 0.0, %v248
    %v250 = vpop.f32.mrb[0].mxu0
    %v251 = vadd.f32 0.0, %v250
    %252 = vmatprep.mubr.bf16.mxu0 0
    %253 = vmatmul.mubr.bf16.gmra.mrb[0].mxu0 %v160
    %v254 = vpop.f32.mrb[0].mxu0
    %v255 = vadd.f32 0.0, %v254
    %v256 = vpop.f32.mrb[0].mxu0
    %v257 = vadd.f32 0.0, %v256
    %v258 = vpop.f32.mrb[0].mxu0
    %v259 = vadd.f32 0.0, %v258
    %v260 = vpop.f32.mrb[0].mxu0
    %v261 = vadd.f32 0.0, %v260
    %262 = vdwg.mxu0
    %v263 = vld [vmem:[%s2] sm:$0x3]
    %v265 = vlaneseq
    %v266 = vshrl.u32 %v265, 7
    %v267 = vsub.s32 0, %v266
    %v268 = vrot.slane %v263, %v267
    %v269 = vlaneseq
    %v270 = vshrl.u32 %v269, 7
    %v271 = vsub.s32 1, %v270
    %v272 = vrot.slane %v263, %v271
    %v275 = vmul.f32 %v245, %v268
    %v276 = vmul.f32 %v247, %v272
    %v277 = vmul.f32 %v249, %v268
    %v278 = vmul.f32 %v251, %v272
    %v279 = vmul.f32 %v255, %v268
    %v280 = vmul.f32 %v257, %v272
    %v281 = vmul.f32 %v259, %v268
    %v282 = vmul.f32 %v261, %v272
    %s283 = smul.u32 0, 256
    %v284 = vlaneseq
    %v285 = vand.u32 %v284, 127
    %v286 = vadd.s32 %v285, 128
    %v287 = vstv %s283
    %v288 = vadd.s32 %v287, %v285
    %v289 = vadd.s32 %v287, %v286
    %290 = vset.pattern.permute.xlu0 0
    %291 = vperm.xlu0 %290, %v29
    %v292 = vpop.permute.xlu0 %291
    %293 = vset.pattern.permute.xlu0 0
    %294 = vperm.xlu0 %293, %v30
    %v295 = vpop.permute.xlu0 %294
    %296 = vset.pattern.permute.xlu0 0
    %297 = vperm.xlu0 %296, %v31
    %v298 = vpop.permute.xlu0 %297
    %299 = vset.pattern.permute.xlu0 0
    %300 = vperm.xlu0 %299, %v32
    %v301 = vpop.permute.xlu0 %300
    %vm302 = vcmp.eq.s32.totalorder %v288, %v292
    %vm303 = vcmp.eq.s32.totalorder %v289, %v292
    %vm304 = vcmp.eq.s32.totalorder %v288, %v295
    %vm305 = vcmp.eq.s32.totalorder %v289, %v295
    %vm306 = vcmp.eq.s32.totalorder %v288, %v298
    %vm307 = vcmp.eq.s32.totalorder %v289, %v298
    %vm308 = vcmp.eq.s32.totalorder %v288, %v301
    %vm309 = vcmp.eq.s32.totalorder %v289, %v301
    %v310 = vsub.f32 %v275, 9.0
    %v311 = vsub.f32 %v276, 9.0
    %v312 = vsub.f32 %v277, 9.0
    %v313 = vsub.f32 %v278, 9.0
    %v314 = vsub.f32 %v279, 9.0
    %v315 = vsub.f32 %v280, 9.0
    %v316 = vsub.f32 %v281, 9.0
    %v317 = vsub.f32 %v282, 9.0
    %v318 = vsel %vm302, %v310, %v275
    %v319 = vsel %vm303, %v311, %v276
    %v320 = vsel %vm304, %v312, %v277
    %v321 = vsel %vm305, %v313, %v278
    %v322 = vsel %vm306, %v314, %v279
    %v323 = vsel %vm307, %v315, %v280
    %v324 = vsel %vm308, %v316, %v281
    %v325 = vsel %vm309, %v317, %v282
    %326 = vst [vmem:[#allocation2] sm:$0xff] %v318
    %327 = vst [vmem:[#allocation2 + $0x8] sm:$0xff] %v319
    %328 = vst [vmem:[#allocation2 + $0x10] sm:$0xff] %v320
    %329 = vst [vmem:[#allocation2 + $0x18] sm:$0xff] %v321
    %330 = vst [vmem:[#allocation2 + $0x20] sm:$0xff] %v322
    %331 = vst [vmem:[#allocation2 + $0x28] sm:$0xff] %v323
    %332 = vst [vmem:[#allocation2 + $0x30] sm:$0xff] %v324
    %333 = vst [vmem:[#allocation2 + $0x38] sm:$0xff] %v325
    // Predicated region
    $region18: #{tpu_custom_call.1} parent=1 // pred_check
      _
    $region19: #{tpu_custom_call.1} parent=1 // pred_check_branch
      %335 = sbr.rel (0) target = $region21
    $region20: #{tpu_custom_call.1} parent=1 // pred_region
      %s337 = ssub.s32 1024, 1024
      %338 = vsyncadd [#allocation3], %s337
      %s339 = sshll.u32 [#allocation2], 4
      %s340 = int_to_ptr.vmem [resolvable:$true] %s339
      %345 = dma.vmem_to_hbm [thread:$0]  %s340, 1024, %s4, [#allocation3], 256, 256, 16
    $region21: #{tpu_custom_call.1} parent=1 // pred_fallthru
      _
    // Predicated region
    $region22: #{tpu_custom_call.1} parent=1 // pred_check
      _
    $region23: #{tpu_custom_call.1} parent=1 // pred_check_branch
      %347 = sbr.rel (0) target = $region25
    $region24: #{tpu_custom_call.1} parent=1 // pred_region
      %348 = dma.done [#allocation3], 1024
    $region25: #{tpu_custom_call.1} parent=1 // pred_fallthru
      _
    %349 = vsyncpa [#allocation3], 1

</llo_original>
